<compile_context>
chip_gen: v7x
topology: tpu7x:2x2x1
jax: 0.10.0
libtpu: 0.0.40
codegen_flags: <defaults>
</compile_context>

<pallas_src>
import math
from functools import partial

import jax
import jax.numpy as jnp
from jax.experimental import pallas as pl
from jax.experimental.pallas import tpu as pltpu  # noqa: F401  (TPU backend)


# ----------------------------------------------------------------------------- kernel

def _make_fused_tcn_kernel(n_layers):
    """Kernel body signature: (x_ref, w1, b1, w2, b2, ..., wn, bn, o_ref)."""

    def kernel(x_ref, *refs):
        o_ref = refs[-1]
        h = x_ref[...]                                   # (expected_len*B, C_in), f32
        for l in range(n_layers):
            w_ref = refs[2 * l]                          # (K=3, C_in_l, C_out_l)
            b_ref = refs[2 * l + 1]                      # (1, C_out_l)
            m = h.shape[0] // 3                          # rows of this layer's output (static)
            acc = jnp.dot(h[0 * m:1 * m, :], w_ref[0],
                          preferred_element_type=jnp.float32)
            acc = acc + jnp.dot(h[1 * m:2 * m, :], w_ref[1],
                                preferred_element_type=jnp.float32)
            acc = acc + jnp.dot(h[2 * m:3 * m, :], w_ref[2],
                                preferred_element_type=jnp.float32)
            h = acc + b_ref[...]                         # (m, C_out_l)
        o_ref[...] = h                                   # (B*output_size, 1)

    return kernel


# ----------------------------------------------------------------------------- wrapper

def tcn_forward(prepared_params, expected_len, output_size, x):
    """prepared_params: [(w (3, C_in, C_out), b (1, C_out)), ...];  x: (B, seq_len, input_size).

    Returns (B, output_size)."""
    B, seq_len, c_in = x.shape
    n_layers = len(prepared_params)
    assert expected_len == output_size * 3 ** n_layers
    assert seq_len <= expected_len, "input longer than the network's receptive field"

    # Left-pad with zeros so the last seq_len steps hold x (== padded[:, -seq_len:, :] = x).
    padded = jnp.pad(x.astype(jnp.float32),
                     ((0, 0), (expected_len - seq_len, 0), (0, 0)))

    # One-time layout plumbing (tiny array, done in XLA): reorder rows to
    # (d_1, d_2, ..., d_n, batch, out_pos) where d_l is the base-3 sequence digit contracted by
    # layer l.  Then every in-kernel unfold is a contiguous row-block slice, and the final rows
    # are already in (batch, out_pos) order -> no post-kernel transpose.
    a = padded.reshape((B, output_size) + (3,) * n_layers + (c_in,))
    perm = tuple(range(n_layers + 1, 1, -1)) + (0, 1, n_layers + 2)
    x0 = jnp.transpose(a, perm).reshape(expected_len * B, c_in)

    out_rows = B * output_size
    kernel = _make_fused_tcn_kernel(n_layers)

    in_specs = [pl.BlockSpec(x0.shape, lambda i: (0, 0))]
    operands = [x0]
    for w, b in prepared_params:
        in_specs.append(pl.BlockSpec(w.shape, lambda i: (0, 0, 0)))
        in_specs.append(pl.BlockSpec(b.shape, lambda i: (0, 0)))
        operands.extend([w, b])

    out = pl.pallas_call(
        kernel,
        out_shape=jax.ShapeDtypeStruct((out_rows, 1), jnp.float32),
        grid=(1,),
        in_specs=in_specs,
        out_specs=pl.BlockSpec((out_rows, 1), lambda i: (0, 0)),
    )(*operands)

    # rows already ordered (batch, out_pos); just drop the channel dim.
    return out.reshape(B, output_size)


# ----------------------------------------------------------------------------- params

def init_tcn_params(key, input_size, hidden_size, output_size, sequence_length=30):
    """torch.rand-style uniform[0,1) init; returns raw (kernel (O, C, K), bias (O,)) per layer."""
    n_layers = math.ceil(math.log(sequence_length / output_size, 3))
    expected_len = output_size * 3 ** n_layers
    layer_sizes = ([(input_size, hidden_size)]
                   + [(hidden_size, hidden_size)] * (n_layers - 2)
                   + [(hidden_size, 1)])
    params = []
    for c_in, c_out in layer_sizes:
        key, k_kern, k_bias = jax.random.split(key, 3)
        kern = jax.random.uniform(k_kern, (c_out, c_in, 3), dtype=jnp.float32)
        bias = jax.random.uniform(k_bias, (c_out,), dtype=jnp.float32)
        params.append((kern, bias))
    return params, expected_len


def prepare_params(raw_params):
    """One-time weight permutation (hoisted out of the forward path):
    kernel (O, C, K) -> (K, C, O);  bias (O,) -> (1, O)."""
    return [(jnp.transpose(k, (2, 1, 0)), b.reshape(1, -1)) for k, b in raw_params]


# ----------------------------------------------------------------------------- reference

def tcn_reference(raw_params, expected_len, x):
    """Pure-JAX transliteration of the PyTorch module (for the correctness check)."""
    B, seq_len, _ = x.shape
    padded = jnp.pad(x, ((0, 0), (expected_len - seq_len, 0), (0, 0)))
    h = jnp.transpose(padded, (0, 2, 1))                       # (B, C, L)
    for kern, bias in raw_params:
        O, C, K = kern.shape
        Bb, Cc, L = h.shape
        Lout = L // K
        u = h.reshape(Bb, Cc, Lout, K)
        u = jnp.transpose(u, (0, 2, 1, 3)).reshape(Bb, Lout, Cc * K)
        out = u @ kern.reshape(O, Cc * K).T + bias             # (B, Lout, O)
        h = jnp.transpose(out, (0, 2, 1))
    return h[:, 0, :]                                          # (B, output_size)


# ----------------------------------------------------------------------------- main

if __name__ == "__main__":
    input_size, hidden_size, output_size = 4, 32, 3
    batch_size, seq_len = 2, 30

    key = jax.random.PRNGKey(0)
    key, k_params, k_x = jax.random.split(key, 3)
    raw_params, expected_len = init_tcn_params(k_params, input_size, hidden_size, output_size)
    params = prepare_params(raw_params)          # hoisted: done once, not per forward call
    x = jax.random.normal(k_x, (batch_size, seq_len, input_size), dtype=jnp.float32)

    fwd = jax.jit(partial(tcn_forward, params, expected_len, output_size))
    out = jax.block_until_ready(fwd(x))

    assert out.shape == (batch_size, output_size), out.shape
    assert bool(jnp.all(jnp.isfinite(out)))

    ref = tcn_reference(raw_params, expected_len, x)
    assert bool(jnp.allclose(out, ref, rtol=1e-4, atol=1e-2)), (out, ref)

    print("KERNEL_OK")
</pallas_src>

<mosaic_0001>
module attributes {stable_mosaic.version = 11 : i64} {
  func.func @kernel(%arg0: i32, %arg1: memref<162x4xf32, #tpu.memory_space<vmem>>, %arg2: memref<3x4x32xf32, #tpu.memory_space<vmem>>, %arg3: memref<1x32xf32, #tpu.memory_space<vmem>>, %arg4: memref<3x32x32xf32, #tpu.memory_space<vmem>>, %arg5: memref<1x32xf32, #tpu.memory_space<vmem>>, %arg6: memref<3x32x1xf32, #tpu.memory_space<vmem>>, %arg7: memref<1x1xf32, #tpu.memory_space<vmem>>, %arg8: memref<6x1xf32, #tpu.memory_space<vmem>>) attributes {dimension_semantics = [#tpu.dimension_semantics<arbitrary>], iteration_bounds = array<i64: 1>, scalar_prefetch = 0 : i64, scratch_operands = 0 : i64, tpu.core_type = #tpu.core_type<tc>, window_params = [{pipeline_mode = #tpu.pipeline_mode<synchronous>, transform_indices = @transform_0, window_bounds = array<i64: 162, 4>}, {pipeline_mode = #tpu.pipeline_mode<synchronous>, transform_indices = @transform_1, window_bounds = array<i64: 3, 4, 32>}, {pipeline_mode = #tpu.pipeline_mode<synchronous>, transform_indices = @transform_2, window_bounds = array<i64: 1, 32>}, {pipeline_mode = #tpu.pipeline_mode<synchronous>, transform_indices = @transform_3, window_bounds = array<i64: 3, 32, 32>}, {pipeline_mode = #tpu.pipeline_mode<synchronous>, transform_indices = @transform_4, window_bounds = array<i64: 1, 32>}, {pipeline_mode = #tpu.pipeline_mode<synchronous>, transform_indices = @transform_5, window_bounds = array<i64: 3, 32, 1>}, {pipeline_mode = #tpu.pipeline_mode<synchronous>, transform_indices = @transform_6, window_bounds = array<i64: 1, 1>}, {pipeline_mode = #tpu.pipeline_mode<synchronous>, transform_indices = @transform_7, window_bounds = array<i64: 6, 1>}]} {
    %c0 = arith.constant 0 : index
    %c0_0 = arith.constant 0 : index
    %0 = vector.load %arg1[%c0, %c0_0] : memref<162x4xf32, #tpu.memory_space<vmem>>, vector<162x4xf32>
    %1 = vector.extract_strided_slice %0 {offsets = [0, 0], sizes = [54, 4], strides = [1, 1]} : vector<162x4xf32> to vector<54x4xf32>
    %c0_1 = arith.constant 0 : index
    %c0_2 = arith.constant 0 : index
    %c0_3 = arith.constant 0 : index
    %2 = vector.load %arg2[%c0_1, %c0_2, %c0_3] : memref<3x4x32xf32, #tpu.memory_space<vmem>>, vector<1x4x32xf32>
    %3 = vector.shape_cast %2 : vector<1x4x32xf32> to vector<4x32xf32>
    %cst = arith.constant dense<0.000000e+00> : vector<54x32xf32>
    %4 = tpu.matmul %1, %3, %cst {dimension_numbers = #tpu.dot_dimension_numbers<[1], [0], [0], [1], [0, 0, 1, 1], [], []>} : vector<54x4xf32>, vector<4x32xf32>, vector<54x32xf32> -> vector<54x32xf32>
    %5 = vector.extract_strided_slice %0 {offsets = [54, 0], sizes = [54, 4], strides = [1, 1]} : vector<162x4xf32> to vector<54x4xf32>
    %c1 = arith.constant 1 : index
    %c0_4 = arith.constant 0 : index
    %c0_5 = arith.constant 0 : index
    %6 = vector.load %arg2[%c1, %c0_4, %c0_5] : memref<3x4x32xf32, #tpu.memory_space<vmem>>, vector<1x4x32xf32>
    %7 = vector.shape_cast %6 : vector<1x4x32xf32> to vector<4x32xf32>
    %cst_6 = arith.constant dense<0.000000e+00> : vector<54x32xf32>
    %8 = tpu.matmul %5, %7, %cst_6 {dimension_numbers = #tpu.dot_dimension_numbers<[1], [0], [0], [1], [0, 0, 1, 1], [], []>} : vector<54x4xf32>, vector<4x32xf32>, vector<54x32xf32> -> vector<54x32xf32>
    %9 = arith.addf %4, %8 : vector<54x32xf32>
    %10 = vector.extract_strided_slice %0 {offsets = [108, 0], sizes = [54, 4], strides = [1, 1]} : vector<162x4xf32> to vector<54x4xf32>
    %c2 = arith.constant 2 : index
    %c0_7 = arith.constant 0 : index
    %c0_8 = arith.constant 0 : index
    %11 = vector.load %arg2[%c2, %c0_7, %c0_8] : memref<3x4x32xf32, #tpu.memory_space<vmem>>, vector<1x4x32xf32>
    %12 = vector.shape_cast %11 : vector<1x4x32xf32> to vector<4x32xf32>
    %cst_9 = arith.constant dense<0.000000e+00> : vector<54x32xf32>
    %13 = tpu.matmul %10, %12, %cst_9 {dimension_numbers = #tpu.dot_dimension_numbers<[1], [0], [0], [1], [0, 0, 1, 1], [], []>} : vector<54x4xf32>, vector<4x32xf32>, vector<54x32xf32> -> vector<54x32xf32>
    %14 = arith.addf %9, %13 : vector<54x32xf32>
    %c0_10 = arith.constant 0 : index
    %c0_11 = arith.constant 0 : index
    %15 = vector.load %arg3[%c0_10, %c0_11] : memref<1x32xf32, #tpu.memory_space<vmem>>, vector<1x32xf32>
    %16 = vector.broadcast %15 : vector<1x32xf32> to vector<54x32xf32>
    %17 = arith.addf %14, %16 : vector<54x32xf32>
    %18 = vector.extract_strided_slice %17 {offsets = [0, 0], sizes = [18, 32], strides = [1, 1]} : vector<54x32xf32> to vector<18x32xf32>
    %c0_12 = arith.constant 0 : index
    %c0_13 = arith.constant 0 : index
    %c0_14 = arith.constant 0 : index
    %19 = vector.load %arg4[%c0_12, %c0_13, %c0_14] : memref<3x32x32xf32, #tpu.memory_space<vmem>>, vector<1x32x32xf32>
    %20 = vector.shape_cast %19 : vector<1x32x32xf32> to vector<32x32xf32>
    %cst_15 = arith.constant dense<0.000000e+00> : vector<18x32xf32>
    %21 = tpu.matmul %18, %20, %cst_15 {dimension_numbers = #tpu.dot_dimension_numbers<[1], [0], [0], [1], [0, 0, 1, 1], [], []>} : vector<18x32xf32>, vector<32x32xf32>, vector<18x32xf32> -> vector<18x32xf32>
    %22 = vector.extract_strided_slice %17 {offsets = [18, 0], sizes = [18, 32], strides = [1, 1]} : vector<54x32xf32> to vector<18x32xf32>
    %c1_16 = arith.constant 1 : index
    %c0_17 = arith.constant 0 : index
    %c0_18 = arith.constant 0 : index
    %23 = vector.load %arg4[%c1_16, %c0_17, %c0_18] : memref<3x32x32xf32, #tpu.memory_space<vmem>>, vector<1x32x32xf32>
    %24 = vector.shape_cast %23 : vector<1x32x32xf32> to vector<32x32xf32>
    %cst_19 = arith.constant dense<0.000000e+00> : vector<18x32xf32>
    %25 = tpu.matmul %22, %24, %cst_19 {dimension_numbers = #tpu.dot_dimension_numbers<[1], [0], [0], [1], [0, 0, 1, 1], [], []>} : vector<18x32xf32>, vector<32x32xf32>, vector<18x32xf32> -> vector<18x32xf32>
    %26 = arith.addf %21, %25 : vector<18x32xf32>
    %27 = vector.extract_strided_slice %17 {offsets = [36, 0], sizes = [18, 32], strides = [1, 1]} : vector<54x32xf32> to vector<18x32xf32>
    %c2_20 = arith.constant 2 : index
    %c0_21 = arith.constant 0 : index
    %c0_22 = arith.constant 0 : index
    %28 = vector.load %arg4[%c2_20, %c0_21, %c0_22] : memref<3x32x32xf32, #tpu.memory_space<vmem>>, vector<1x32x32xf32>
    %29 = vector.shape_cast %28 : vector<1x32x32xf32> to vector<32x32xf32>
    %cst_23 = arith.constant dense<0.000000e+00> : vector<18x32xf32>
    %30 = tpu.matmul %27, %29, %cst_23 {dimension_numbers = #tpu.dot_dimension_numbers<[1], [0], [0], [1], [0, 0, 1, 1], [], []>} : vector<18x32xf32>, vector<32x32xf32>, vector<18x32xf32> -> vector<18x32xf32>
    %31 = arith.addf %26, %30 : vector<18x32xf32>
    %c0_24 = arith.constant 0 : index
    %c0_25 = arith.constant 0 : index
    %32 = vector.load %arg5[%c0_24, %c0_25] : memref<1x32xf32, #tpu.memory_space<vmem>>, vector<1x32xf32>
    %33 = vector.broadcast %32 : vector<1x32xf32> to vector<18x32xf32>
    %34 = arith.addf %31, %33 : vector<18x32xf32>
    %35 = vector.extract_strided_slice %34 {offsets = [0, 0], sizes = [6, 32], strides = [1, 1]} : vector<18x32xf32> to vector<6x32xf32>
    %c0_26 = arith.constant 0 : index
    %c0_27 = arith.constant 0 : index
    %c0_28 = arith.constant 0 : index
    %36 = vector.load %arg6[%c0_26, %c0_27, %c0_28] : memref<3x32x1xf32, #tpu.memory_space<vmem>>, vector<1x32x1xf32>
    %37 = vector.shape_cast %36 : vector<1x32x1xf32> to vector<32x1xf32>
    %cst_29 = arith.constant dense<0.000000e+00> : vector<6x1xf32>
    %38 = tpu.matmul %35, %37, %cst_29 {dimension_numbers = #tpu.dot_dimension_numbers<[1], [0], [0], [1], [0, 0, 1, 1], [], []>} : vector<6x32xf32>, vector<32x1xf32>, vector<6x1xf32> -> vector<6x1xf32>
    %39 = vector.extract_strided_slice %34 {offsets = [6, 0], sizes = [6, 32], strides = [1, 1]} : vector<18x32xf32> to vector<6x32xf32>
    %c1_30 = arith.constant 1 : index
    %c0_31 = arith.constant 0 : index
    %c0_32 = arith.constant 0 : index
    %40 = vector.load %arg6[%c1_30, %c0_31, %c0_32] : memref<3x32x1xf32, #tpu.memory_space<vmem>>, vector<1x32x1xf32>
    %41 = vector.shape_cast %40 : vector<1x32x1xf32> to vector<32x1xf32>
    %cst_33 = arith.constant dense<0.000000e+00> : vector<6x1xf32>
    %42 = tpu.matmul %39, %41, %cst_33 {dimension_numbers = #tpu.dot_dimension_numbers<[1], [0], [0], [1], [0, 0, 1, 1], [], []>} : vector<6x32xf32>, vector<32x1xf32>, vector<6x1xf32> -> vector<6x1xf32>
    %43 = arith.addf %38, %42 : vector<6x1xf32>
    %44 = vector.extract_strided_slice %34 {offsets = [12, 0], sizes = [6, 32], strides = [1, 1]} : vector<18x32xf32> to vector<6x32xf32>
    %c2_34 = arith.constant 2 : index
    %c0_35 = arith.constant 0 : index
    %c0_36 = arith.constant 0 : index
    %45 = vector.load %arg6[%c2_34, %c0_35, %c0_36] : memref<3x32x1xf32, #tpu.memory_space<vmem>>, vector<1x32x1xf32>
    %46 = vector.shape_cast %45 : vector<1x32x1xf32> to vector<32x1xf32>
    %cst_37 = arith.constant dense<0.000000e+00> : vector<6x1xf32>
    %47 = tpu.matmul %44, %46, %cst_37 {dimension_numbers = #tpu.dot_dimension_numbers<[1], [0], [0], [1], [0, 0, 1, 1], [], []>} : vector<6x32xf32>, vector<32x1xf32>, vector<6x1xf32> -> vector<6x1xf32>
    %48 = arith.addf %43, %47 : vector<6x1xf32>
    %c0_38 = arith.constant 0 : index
    %c0_39 = arith.constant 0 : index
    %49 = vector.load %arg7[%c0_38, %c0_39] : memref<1x1xf32, #tpu.memory_space<vmem>>, vector<1x1xf32>
    %50 = vector.broadcast %49 : vector<1x1xf32> to vector<6x1xf32>
    %51 = arith.addf %48, %50 : vector<6x1xf32>
    %c0_40 = arith.constant 0 : index
    %c0_41 = arith.constant 0 : index
    %52 = vector.load %arg8[%c0_40, %c0_41] : memref<6x1xf32, #tpu.memory_space<vmem>>, vector<6x1xf32>
    tpu.vector_store %arg8[%c0_40, %c0_41], %51 {strides = array<i32>} : memref<6x1xf32, #tpu.memory_space<vmem>>, vector<6x1xf32>,
    return
  }
  func.func @transform_0(%arg0: i32) -> (i32, i32) {
    %c0_i32 = arith.constant 0 : i32
    %c0_i32_0 = arith.constant 0 : i32
    %c0_i32_1 = arith.constant 0 : i32
    return %c0_i32, %c0_i32_0 : i32, i32
  }
  func.func @transform_1(%arg0: i32) -> (i32, i32, i32) {
    %c0_i32 = arith.constant 0 : i32
    %c0_i32_0 = arith.constant 0 : i32
    %c0_i32_1 = arith.constant 0 : i32
    %c0_i32_2 = arith.constant 0 : i32
    return %c0_i32, %c0_i32_0, %c0_i32_1 : i32, i32, i32
  }
  func.func @transform_2(%arg0: i32) -> (i32, i32) {
    %c0_i32 = arith.constant 0 : i32
    %c0_i32_0 = arith.constant 0 : i32
    %c0_i32_1 = arith.constant 0 : i32
    return %c0_i32, %c0_i32_0 : i32, i32
  }
  func.func @transform_3(%arg0: i32) -> (i32, i32, i32) {
    %c0_i32 = arith.constant 0 : i32
    %c0_i32_0 = arith.constant 0 : i32
    %c0_i32_1 = arith.constant 0 : i32
    %c0_i32_2 = arith.constant 0 : i32
    return %c0_i32, %c0_i32_0, %c0_i32_1 : i32, i32, i32
  }
  func.func @transform_4(%arg0: i32) -> (i32, i32) {
    %c0_i32 = arith.constant 0 : i32
    %c0_i32_0 = arith.constant 0 : i32
    %c0_i32_1 = arith.constant 0 : i32
    return %c0_i32, %c0_i32_0 : i32, i32
  }
  func.func @transform_5(%arg0: i32) -> (i32, i32, i32) {
    %c0_i32 = arith.constant 0 : i32
    %c0_i32_0 = arith.constant 0 : i32
    %c0_i32_1 = arith.constant 0 : i32
    %c0_i32_2 = arith.constant 0 : i32
    return %c0_i32, %c0_i32_0, %c0_i32_1 : i32, i32, i32
  }
  func.func @transform_6(%arg0: i32) -> (i32, i32) {
    %c0_i32 = arith.constant 0 : i32
    %c0_i32_0 = arith.constant 0 : i32
    %c0_i32_1 = arith.constant 0 : i32
    return %c0_i32, %c0_i32_0 : i32, i32
  }
  func.func @transform_7(%arg0: i32) -> (i32, i32) {
    %c0_i32 = arith.constant 0 : i32
    %c0_i32_0 = arith.constant 0 : i32
    %c0_i32_1 = arith.constant 0 : i32
    return %c0_i32, %c0_i32_0 : i32, i32
  }
}

</mosaic_0001>

<llo_original>
// kernel: tcn_forward.1
$region0: #{tcn_forward.1}
  #allocation0 [shape = 'u32[]', space=smem, size = 0x4, offset = 0x4, fixed_abs, tag = 'smem constant byte address 0x4 - core index']
  #allocation1 [shape = 'u32[144,128]{1,0:T(1,128)}', space=vmem, size = 0x12000, scoped, tag = 'internal scratch']
  #allocation2 [shape = 'f32[1,1]{1,0:T(1,128)S(1)}', space=vmem, size = 0x200, scoped, tag = 'scoped memory for tcn_forward.1']
  %s0 = inlined_call_operand.vmem [shape: f32[162,4], index: 0, kind: input, shape index: {}]
  %s1 = inlined_call_operand.vmem [shape: f32[3,4,32], index: 1, kind: input, shape index: {}]
  %s2 = inlined_call_operand.vmem [shape: f32[1,32], index: 2, kind: input, shape index: {}]
  %s3 = inlined_call_operand.vmem [shape: f32[3,32,32], index: 3, kind: input, shape index: {}]
  %s4 = inlined_call_operand.vmem [shape: f32[1,32], index: 4, kind: input, shape index: {}]
  %s5 = inlined_call_operand.vmem [shape: f32[3,32,1], index: 5, kind: input, shape index: {}]
  %s6 = inlined_call_operand.<no memory space> [shape: f32[1,1], index: 6, kind: input, shape index: {}]
  %s7 = inlined_call_operand.vmem [shape: f32[6,1], index: 7, kind: output, shape index: {}]
  %s8 = sld [smem:[#allocation0]]
  $region38: #{tcn_forward.1} parent=0
    _
  %s10 = ssub.s32 1, %s8
  %s11 = scalar_select 0, %s10, %s8
  %v12 = vstv %s6
  %13 = vst [vmem:[#allocation2] sm:$0x1] %v12
  // Predicated region
  $region2: #{tcn_forward.1} parent=0 // pred_check
    _
  $region3: #{tcn_forward.1} parent=0 // pred_check_branch
    %15 = sbr.rel (0) target = $region5
  $region4: #{tcn_forward.1} parent=0 // pred_region
    _
  $region5: #{tcn_forward.1} parent=0 // pred_fallthru
    _
  // Predicated region
  $region6: #{tcn_forward.1} parent=0 // pred_check
    _
  $region7: #{tcn_forward.1} parent=0 // pred_check_branch
    %17 = sbr.rel (0) target = $region9
  $region8: #{tcn_forward.1} parent=0 // pred_region
    _
  $region9: #{tcn_forward.1} parent=0 // pred_fallthru
    _
  // Predicated region
  $region10: #{tcn_forward.1} parent=0 // pred_check
    _
  $region11: #{tcn_forward.1} parent=0 // pred_check_branch
    %19 = sbr.rel (0) target = $region13
  $region12: #{tcn_forward.1} parent=0 // pred_region
    _
  $region13: #{tcn_forward.1} parent=0 // pred_fallthru
    _
  // Predicated region
  $region14: #{tcn_forward.1} parent=0 // pred_check
    _
  $region15: #{tcn_forward.1} parent=0 // pred_check_branch
    %21 = sbr.rel (0) target = $region17
  $region16: #{tcn_forward.1} parent=0 // pred_region
    _
  $region17: #{tcn_forward.1} parent=0 // pred_fallthru
    _
  // Predicated region
  $region18: #{tcn_forward.1} parent=0 // pred_check
    _
  $region19: #{tcn_forward.1} parent=0 // pred_check_branch
    %23 = sbr.rel (0) target = $region21
  $region20: #{tcn_forward.1} parent=0 // pred_region
    _
  $region21: #{tcn_forward.1} parent=0 // pred_fallthru
    _
  // Predicated region
  $region22: #{tcn_forward.1} parent=0 // pred_check
    _
  $region23: #{tcn_forward.1} parent=0 // pred_check_branch
    %25 = sbr.rel (0) target = $region25
  $region24: #{tcn_forward.1} parent=0 // pred_region
    _
  $region25: #{tcn_forward.1} parent=0 // pred_fallthru
    _
  // Predicated region
  $region26: #{tcn_forward.1} parent=0 // pred_check
    _
  $region27: #{tcn_forward.1} parent=0 // pred_check_branch
    %27 = sbr.rel (0) target = $region29
  $region28: #{tcn_forward.1} parent=0 // pred_region
    _
  $region29: #{tcn_forward.1} parent=0 // pred_fallthru
    _
  %v28 = vld [vmem:[%s0] sm:$0xff]
  %v29 = vld [vmem:[%s0 + $0x8] sm:$0xff]
  %v30 = vld [vmem:[%s0 + $0x10] sm:$0xff]
  %v31 = vld [vmem:[%s0 + $0x18] sm:$0xff]
  %v32 = vld [vmem:[%s0 + $0x20] sm:$0xff]
  %v33 = vld [vmem:[%s0 + $0x28] sm:$0xff]
  %v34 = vld [vmem:[%s0 + $0x30] sm:$0xff]
  %v35 = vld [vmem:[%s0 + $0x38] sm:$0xff]
  %v36 = vld [vmem:[%s0 + $0x40] sm:$0xff]
  %v37 = vld [vmem:[%s0 + $0x48] sm:$0xff]
  %v38 = vld [vmem:[%s0 + $0x50] sm:$0xff]
  %v39 = vld [vmem:[%s0 + $0x58] sm:$0xff]
  %v40 = vld [vmem:[%s0 + $0x60] sm:$0xff]
  %v41 = vld [vmem:[%s0 + $0x68] sm:$0xff]
  %v42 = vld [vmem:[%s0 + $0x70] sm:$0xff]
  %v43 = vld [vmem:[%s0 + $0x78] sm:$0xff]
  %v44 = vld [vmem:[%s0 + $0x80] sm:$0xff]
  %v45 = vld [vmem:[%s0 + $0x88] sm:$0xff]
  %v46 = vld [vmem:[%s0 + $0x90] sm:$0xff]
  %v47 = vld [vmem:[%s0 + $0x98] sm:$0xff]
  %v48 = vld [vmem:[%s0 + $0xa0] sm:$0x3]
  %v49 = vld [vmem:[%s1] sm:$0xf]
  %s50 = scalar_lea.vmem %s1, 4
  %v51 = vld [vmem:[%s50] sm:$0xf]
  %vm60 = vcmask 1041408
  %v61 = vrot.slane %v34, 6
  %v62 = vrot.slane %v35, 6
  %v63 = vsel %vm60, %v61, %v62
  %v64 = vrot.slane %v36, 6
  %v65 = vsel %vm60, %v62, %v64
  %v66 = vrot.slane %v37, 6
  %v67 = vsel %vm60, %v64, %v66
  %v68 = vrot.slane %v38, 6
  %v69 = vsel %vm60, %v66, %v68
  %v70 = vrot.slane %v39, 6
  %v71 = vsel %vm60, %v68, %v70
  %v72 = vrot.slane %v40, 6
  %v73 = vsel %vm60, %v70, %v72
  %v74 = vrot.slane %v41, 6
  %v75 = vsel %vm60, %v72, %v74
  %vm76 = vcmask 31744
  %v77 = vsel %vm76, %v63, 0
  %v79 = vsel %vm76, %v65, 0
  %v81 = vsel %vm76, %v67, 0
  %v83 = vsel %vm76, %v69, 0
  %v85 = vsel %vm76, %v71, 0
  %v87 = vsel %vm76, %v73, 0
  %v89 = vsel %vm76, %v75, 0
  %vm91 = vcmask 1043456
  %v93 = vsel %vm91, %v51, 0
  %95 = vmatprep.subr.mxu0 0.0
  %96 = vmatpush1.msra.mxu0 %v93
  %97 = vmatprep.subr.mxu0 0.0
  %98 = vmatpush1.msra.mxu0 0.0
  %99 = vmatprep.subr.mxu0 0.0
  %100 = vmatpush1.msra.mxu0 0.0
  %101 = vmatprep.subr.mxu0 0.0
  %102 = vmatpush1.msra.mxu0 0.0
  %103 = vmatprep.subr.mxu0 0.0
  %104 = vmatpush1.msra.mxu0 0.0
  %105 = vmatprep.subr.mxu0 0.0
  %106 = vmatpush1.msra.mxu0 0.0
  %107 = vmatprep.subr.mxu0 0.0
  %108 = vmatpush1.msra.mxu0 0.0
  %109 = vmatprep.subr.mxu0 0.0
  %110 = vmatpush1.msra.mxu0 0.0
  %111 = vmatprep.subr.mxu0 0.0
  %112 = vmatpush1.msra.mxu0 0.0
  %113 = vmatprep.subr.mxu0 0.0
  %114 = vmatpush1.msra.mxu0 0.0
  %115 = vmatprep.subr.mxu0 0.0
  %116 = vmatpush1.msra.mxu0 0.0
  %117 = vmatprep.subr.mxu0 0.0
  %118 = vmatpush1.msra.mxu0 0.0
  %119 = vmatprep.subr.mxu0 0.0
  %120 = vmatpush1.msra.mxu0 0.0
  %121 = vmatprep.subr.mxu0 0.0
  %122 = vmatpush1.msra.mxu0 0.0
  %123 = vmatprep.subr.mxu0 0.0
  %124 = vmatpush1.msra.mxu0 0.0
  %125 = vmatprep.subr.mxu0 0.0
  %126 = vmatpush1.msra.mxu0 0.0
  %127 = vmatprep.subr.mxu0 0.0
  %128 = vmatpush1.msra.mxu0 0.0
  %129 = vmatprep.subr.mxu0 0.0
  %130 = vmatpush1.msra.mxu0 0.0
  %131 = vmatprep.subr.mxu0 0.0
  %132 = vmatpush1.msra.mxu0 0.0
  %133 = vmatprep.subr.mxu0 0.0
  %134 = vmatpush1.msra.mxu0 0.0
  %135 = vmatprep.subr.mxu0 0.0
  %136 = vmatpush1.msra.mxu0 0.0
  %137 = vmatprep.subr.mxu0 0.0
  %138 = vmatpush1.msra.mxu0 0.0
  %139 = vmatprep.subr.mxu0 0.0
  %140 = vmatpush1.msra.mxu0 0.0
  %141 = vmatprep.subr.mxu0 0.0
  %142 = vmatpush1.msra.mxu0 0.0
  %143 = vmatprep.subr.mxu0 0.0
  %144 = vmatpush1.msra.mxu0 0.0
  %145 = vmatprep.subr.mxu0 0.0
  %146 = vmatpush1.msra.mxu0 0.0
  %147 = vmatprep.subr.mxu0 0.0
  %148 = vmatpush1.msra.mxu0 0.0
  %149 = vmatprep.subr.mxu0 0.0
  %150 = vmatpush1.msra.mxu0 0.0
  %151 = vmatprep.subr.mxu0 0.0
  %152 = vmatpush1.msra.mxu0 0.0
  %153 = vmatprep.subr.mxu0 0.0
  %154 = vmatpush1.msra.mxu0 0.0
  %155 = vmatprep.subr.mxu0 0.0
  %156 = vmatpush1.msra.mxu0 0.0
  %157 = vmatprep.subr.mxu0 0.0
  %158 = vmatpush1.msra.mxu0 0.0
  %159 = vmatprep.mubr.f32.mxu0 0.0
  %160 = vmatmul.mubr.f32.gmra.mrb[0].mxu0 %v77
  %v161 = vpop.f32.mrb[0].mxu0
  %v162 = vadd.f32 0.0, %v161
  %v163 = vpop.f32.mrb[0].mxu0
  %164 = vmatprep.mubr.f32.mxu0 0.0
  %165 = vmatmul.mubr.f32.gmra.mrb[0].mxu0 %v79
  %v166 = vpop.f32.mrb[0].mxu0
  %v167 = vadd.f32 0.0, %v166
  %v168 = vpop.f32.mrb[0].mxu0
  %169 = vmatprep.mubr.f32.mxu0 0.0
  %170 = vmatmul.mubr.f32.gmra.mrb[0].mxu0 %v81
  %v171 = vpop.f32.mrb[0].mxu0
  %v172 = vadd.f32 0.0, %v171
  %v173 = vpop.f32.mrb[0].mxu0
  %174 = vmatprep.mubr.f32.mxu0 0.0
  %175 = vmatmul.mubr.f32.gmra.mrb[0].mxu0 %v83
  %v176 = vpop.f32.mrb[0].mxu0
  %v177 = vadd.f32 0.0, %v176
  %v178 = vpop.f32.mrb[0].mxu0
  %179 = vmatprep.mubr.f32.mxu0 0.0
  %180 = vmatmul.mubr.f32.gmra.mrb[0].mxu0 %v85
  %v181 = vpop.f32.mrb[0].mxu0
  %v182 = vadd.f32 0.0, %v181
  %v183 = vpop.f32.mrb[0].mxu0
  %184 = vmatprep.mubr.f32.mxu0 0.0
  %185 = vmatmul.mubr.f32.gmra.mrb[0].mxu0 %v87
  %v186 = vpop.f32.mrb[0].mxu0
  %v187 = vadd.f32 0.0, %v186
  %v188 = vpop.f32.mrb[0].mxu0
  %189 = vmatprep.mubr.f32.mxu0 0.0
  %190 = vmatmul.mubr.f32.gmra.mrb[0].mxu0 %v89
  %v191 = vpop.f32.mrb[0].mxu0
  %v192 = vadd.f32 0.0, %v191
  %v193 = vpop.f32.mrb[0].mxu0
  %194 = vdwg.mxu0
  %v196 = vsel %vm76, %v28, 0
  %v199 = vsel %vm76, %v29, 0
  %v202 = vsel %vm76, %v30, 0
  %v205 = vsel %vm76, %v31, 0
  %v208 = vsel %vm76, %v32, 0
  %v211 = vsel %vm76, %v33, 0
  %v213 = vsel %vm76, %v34, 0
  %v216 = vsel %vm91, %v49, 0
  %218 = vmatprep.subr.mxu0 0.0
  %219 = vmatpush1.msra.mxu0 %v216
  %220 = vmatprep.subr.mxu0 0.0
  %221 = vmatpush1.msra.mxu0 0.0
  %222 = vmatprep.subr.mxu0 0.0
  %223 = vmatpush1.msra.mxu0 0.0
  %224 = vmatprep.subr.mxu0 0.0
  %225 = vmatpush1.msra.mxu0 0.0
  %226 = vmatprep.subr.mxu0 0.0
  %227 = vmatpush1.msra.mxu0 0.0
  %228 = vmatprep.subr.mxu0 0.0
  %229 = vmatpush1.msra.mxu0 0.0
  %230 = vmatprep.subr.mxu0 0.0
  %231 = vmatpush1.msra.mxu0 0.0
  %232 = vmatprep.subr.mxu0 0.0
  %233 = vmatpush1.msra.mxu0 0.0
  %234 = vmatprep.subr.mxu0 0.0
  %235 = vmatpush1.msra.mxu0 0.0
  %236 = vmatprep.subr.mxu0 0.0
  %237 = vmatpush1.msra.mxu0 0.0
  %238 = vmatprep.subr.mxu0 0.0
  %239 = vmatpush1.msra.mxu0 0.0
  %240 = vmatprep.subr.mxu0 0.0
  %241 = vmatpush1.msra.mxu0 0.0
  %242 = vmatprep.subr.mxu0 0.0
  %243 = vmatpush1.msra.mxu0 0.0
  %244 = vmatprep.subr.mxu0 0.0
  %245 = vmatpush1.msra.mxu0 0.0
  %246 = vmatprep.subr.mxu0 0.0
  %247 = vmatpush1.msra.mxu0 0.0
  %248 = vmatprep.subr.mxu0 0.0
  %249 = vmatpush1.msra.mxu0 0.0
  %250 = vmatprep.subr.mxu0 0.0
  %251 = vmatpush1.msra.mxu0 0.0
  %252 = vmatprep.subr.mxu0 0.0
  %253 = vmatpush1.msra.mxu0 0.0
  %254 = vmatprep.subr.mxu0 0.0
  %255 = vmatpush1.msra.mxu0 0.0
  %256 = vmatprep.subr.mxu0 0.0
  %257 = vmatpush1.msra.mxu0 0.0
  %258 = vmatprep.subr.mxu0 0.0
  %259 = vmatpush1.msra.mxu0 0.0
  %260 = vmatprep.subr.mxu0 0.0
  %261 = vmatpush1.msra.mxu0 0.0
  %262 = vmatprep.subr.mxu0 0.0
  %263 = vmatpush1.msra.mxu0 0.0
  %264 = vmatprep.subr.mxu0 0.0
  %265 = vmatpush1.msra.mxu0 0.0
  %266 = vmatprep.subr.mxu0 0.0
  %267 = vmatpush1.msra.mxu0 0.0
  %268 = vmatprep.subr.mxu0 0.0
  %269 = vmatpush1.msra.mxu0 0.0
  %270 = vmatprep.subr.mxu0 0.0
  %271 = vmatpush1.msra.mxu0 0.0
  %272 = vmatprep.subr.mxu0 0.0
  %273 = vmatpush1.msra.mxu0 0.0
  %274 = vmatprep.subr.mxu0 0.0
  %275 = vmatpush1.msra.mxu0 0.0
  %276 = vmatprep.subr.mxu0 0.0
  %277 = vmatpush1.msra.mxu0 0.0
  %278 = vmatprep.subr.mxu0 0.0
  %279 = vmatpush1.msra.mxu0 0.0
  %280 = vmatprep.subr.mxu0 0.0
  %281 = vmatpush1.msra.mxu0 0.0
  %282 = vmatprep.mubr.f32.mxu0 0.0
  %283 = vmatmul.mubr.f32.gmra.mrb[0].mxu0 %v196
  %v284 = vpop.f32.mrb[0].mxu0
  %v285 = vadd.f32 %v162, %v284
  %v286 = vpop.f32.mrb[0].mxu0
  %287 = vmatprep.mubr.f32.mxu0 0.0
  %288 = vmatmul.mubr.f32.gmra.mrb[0].mxu0 %v199
  %v289 = vpop.f32.mrb[0].mxu0
  %v290 = vadd.f32 %v167, %v289
  %v291 = vpop.f32.mrb[0].mxu0
  %292 = vmatprep.mubr.f32.mxu0 0.0
  %293 = vmatmul.mubr.f32.gmra.mrb[0].mxu0 %v202
  %v294 = vpop.f32.mrb[0].mxu0
  %v295 = vadd.f32 %v172, %v294
  %v296 = vpop.f32.mrb[0].mxu0
  %297 = vmatprep.mubr.f32.mxu0 0.0
  %298 = vmatmul.mubr.f32.gmra.mrb[0].mxu0 %v205
  %v299 = vpop.f32.mrb[0].mxu0
  %v300 = vadd.f32 %v177, %v299
  %v301 = vpop.f32.mrb[0].mxu0
  %302 = vmatprep.mubr.f32.mxu0 0.0
  %303 = vmatmul.mubr.f32.gmra.mrb[0].mxu0 %v208
  %v304 = vpop.f32.mrb[0].mxu0
  %v305 = vadd.f32 %v182, %v304
  %v306 = vpop.f32.mrb[0].mxu0
  %307 = vmatprep.mubr.f32.mxu0 0.0
  %308 = vmatmul.mubr.f32.gmra.mrb[0].mxu0 %v211
  %v309 = vpop.f32.mrb[0].mxu0
  %v310 = vadd.f32 %v187, %v309
  %v311 = vpop.f32.mrb[0].mxu0
  %312 = vmatprep.mubr.f32.mxu0 0.0
  %313 = vmatmul.mubr.f32.gmra.mrb[0].mxu0 %v213
  %v314 = vpop.f32.mrb[0].mxu0
  %v315 = vadd.f32 %v192, %v314
  %v316 = vpop.f32.mrb[0].mxu0
  %317 = vdwg.mxu0
  %s318 = scalar_lea.vmem %s1, 8
  %v319 = vld [vmem:[%s318] sm:$0xf]
  %v327 = vrot.slane %v41, 4
  %v328 = vrot.slane %v42, 4
  %v329 = vsel %vm91, %v327, %v328
  %v330 = vrot.slane %v43, 4
  %v331 = vsel %vm91, %v328, %v330
  %v332 = vrot.slane %v44, 4
  %v333 = vsel %vm91, %v330, %v332
  %v334 = vrot.slane %v45, 4
  %v335 = vsel %vm91, %v332, %v334
  %v336 = vrot.slane %v46, 4
  %v337 = vsel %vm91, %v334, %v336
  %v338 = vrot.slane %v47, 4
  %v339 = vsel %vm91, %v336, %v338
  %v340 = vrot.slane %v48, 4
  %v341 = vsel %vm91, %v338, %v340
  %v342 = vsel %vm76, %v329, 0
  %v344 = vsel %vm76, %v331, 0
  %v346 = vsel %vm76, %v333, 0
  %v348 = vsel %vm76, %v335, 0
  %v350 = vsel %vm76, %v337, 0
  %v352 = vsel %vm76, %v339, 0
  %v354 = vsel %vm76, %v341, 0
  %v357 = vsel %vm91, %v319, 0
  %359 = vmatprep.subr.mxu0 0.0
  %360 = vmatpush1.msra.mxu0 %v357
  %361 = vmatprep.subr.mxu0 0.0
  %362 = vmatpush1.msra.mxu0 0.0
  %363 = vmatprep.subr.mxu0 0.0
  %364 = vmatpush1.msra.mxu0 0.0
  %365 = vmatprep.subr.mxu0 0.0
  %366 = vmatpush1.msra.mxu0 0.0
  %367 = vmatprep.subr.mxu0 0.0
  %368 = vmatpush1.msra.mxu0 0.0
  %369 = vmatprep.subr.mxu0 0.0
  %370 = vmatpush1.msra.mxu0 0.0
  %371 = vmatprep.subr.mxu0 0.0
  %372 = vmatpush1.msra.mxu0 0.0
  %373 = vmatprep.subr.mxu0 0.0
  %374 = vmatpush1.msra.mxu0 0.0
  %375 = vmatprep.subr.mxu0 0.0
  %376 = vmatpush1.msra.mxu0 0.0
  %377 = vmatprep.subr.mxu0 0.0
  %378 = vmatpush1.msra.mxu0 0.0
  %379 = vmatprep.subr.mxu0 0.0
  %380 = vmatpush1.msra.mxu0 0.0
  %381 = vmatprep.subr.mxu0 0.0
  %382 = vmatpush1.msra.mxu0 0.0
  %383 = vmatprep.subr.mxu0 0.0
  %384 = vmatpush1.msra.mxu0 0.0
  %385 = vmatprep.subr.mxu0 0.0
  %386 = vmatpush1.msra.mxu0 0.0
  %387 = vmatprep.subr.mxu0 0.0
  %388 = vmatpush1.msra.mxu0 0.0
  %389 = vmatprep.subr.mxu0 0.0
  %390 = vmatpush1.msra.mxu0 0.0
  %391 = vmatprep.subr.mxu0 0.0
  %392 = vmatpush1.msra.mxu0 0.0
  %393 = vmatprep.subr.mxu0 0.0
  %394 = vmatpush1.msra.mxu0 0.0
  %395 = vmatprep.subr.mxu0 0.0
  %396 = vmatpush1.msra.mxu0 0.0
  %397 = vmatprep.subr.mxu0 0.0
  %398 = vmatpush1.msra.mxu0 0.0
  %399 = vmatprep.subr.mxu0 0.0
  %400 = vmatpush1.msra.mxu0 0.0
  %401 = vmatprep.subr.mxu0 0.0
  %402 = vmatpush1.msra.mxu0 0.0
  %403 = vmatprep.subr.mxu0 0.0
  %404 = vmatpush1.msra.mxu0 0.0
  %405 = vmatprep.subr.mxu0 0.0
  %406 = vmatpush1.msra.mxu0 0.0
  %407 = vmatprep.subr.mxu0 0.0
  %408 = vmatpush1.msra.mxu0 0.0
  %409 = vmatprep.subr.mxu0 0.0
  %410 = vmatpush1.msra.mxu0 0.0
  %411 = vmatprep.subr.mxu0 0.0
  %412 = vmatpush1.msra.mxu0 0.0
  %413 = vmatprep.subr.mxu0 0.0
  %414 = vmatpush1.msra.mxu0 0.0
  %415 = vmatprep.subr.mxu0 0.0
  %416 = vmatpush1.msra.mxu0 0.0
  %417 = vmatprep.subr.mxu0 0.0
  %418 = vmatpush1.msra.mxu0 0.0
  %419 = vmatprep.subr.mxu0 0.0
  %420 = vmatpush1.msra.mxu0 0.0
  %421 = vmatprep.subr.mxu0 0.0
  %422 = vmatpush1.msra.mxu0 0.0
  %423 = vmatprep.mubr.f32.mxu0 0.0
  %424 = vmatmul.mubr.f32.gmra.mrb[0].mxu0 %v342
  %v425 = vpop.f32.mrb[0].mxu0
  %v426 = vadd.f32 0.0, %v425
  %v427 = vpop.f32.mrb[0].mxu0
  %428 = vmatprep.mubr.f32.mxu0 0.0
  %429 = vmatmul.mubr.f32.gmra.mrb[0].mxu0 %v344
  %v430 = vpop.f32.mrb[0].mxu0
  %v431 = vadd.f32 0.0, %v430
  %v432 = vpop.f32.mrb[0].mxu0
  %433 = vmatprep.mubr.f32.mxu0 0.0
  %434 = vmatmul.mubr.f32.gmra.mrb[0].mxu0 %v346
  %v435 = vpop.f32.mrb[0].mxu0
  %v436 = vadd.f32 0.0, %v435
  %v437 = vpop.f32.mrb[0].mxu0
  %438 = vmatprep.mubr.f32.mxu0 0.0
  %439 = vmatmul.mubr.f32.gmra.mrb[0].mxu0 %v348
  %v440 = vpop.f32.mrb[0].mxu0
  %v441 = vadd.f32 0.0, %v440
  %v442 = vpop.f32.mrb[0].mxu0
  %443 = vmatprep.mubr.f32.mxu0 0.0
  %444 = vmatmul.mubr.f32.gmra.mrb[0].mxu0 %v350
  %v445 = vpop.f32.mrb[0].mxu0
  %v446 = vadd.f32 0.0, %v445
  %v447 = vpop.f32.mrb[0].mxu0
  %448 = vmatprep.mubr.f32.mxu0 0.0
  %449 = vmatmul.mubr.f32.gmra.mrb[0].mxu0 %v352
  %v450 = vpop.f32.mrb[0].mxu0
  %v451 = vadd.f32 0.0, %v450
  %v452 = vpop.f32.mrb[0].mxu0
  %453 = vmatprep.mubr.f32.mxu0 0.0
  %454 = vmatmul.mubr.f32.gmra.mrb[0].mxu0 %v354
  %v455 = vpop.f32.mrb[0].mxu0
  %v456 = vadd.f32 0.0, %v455
  %v457 = vpop.f32.mrb[0].mxu0
  %458 = vdwg.mxu0
  %v459 = vadd.f32 %v285, %v426
  %v460 = vadd.f32 %v290, %v431
  %v461 = vadd.f32 %v295, %v436
  %v462 = vadd.f32 %v300, %v441
  %v463 = vadd.f32 %v305, %v446
  %v464 = vadd.f32 %v310, %v451
  %v465 = vadd.f32 %v315, %v456
  %v466 = vld [vmem:[%s2] sm:$0x1]
  %v468 = vlaneseq
  %v469 = vshrl.u32 %v468, 7
  %v470 = vsub.s32 0, %v469
  %v471 = vrot.slane %v466, %v470
  %v473 = vadd.f32 %v459, %v471
  %v474 = vadd.f32 %v460, %v471
  %v475 = vadd.f32 %v461, %v471
  %v476 = vadd.f32 %v462, %v471
  %v477 = vadd.f32 %v463, %v471
  %v478 = vadd.f32 %v464, %v471
  %v479 = vadd.f32 %v465, %v471
  %v480 = vld [vmem:[%s3] sm:$0xff]
  %v481 = vld [vmem:[%s3 + $0x8] sm:$0xff]
  %v482 = vld [vmem:[%s3 + $0x10] sm:$0xff]
  %v483 = vld [vmem:[%s3 + $0x18] sm:$0xff]
  %s484 = scalar_lea.vmem %s3, 32
  %v485 = vld [vmem:[%s484] sm:$0xff]
  %v486 = vld [vmem:[%s484 + $0x8] sm:$0xff]
  %v487 = vld [vmem:[%s484 + $0x10] sm:$0xff]
  %v488 = vld [vmem:[%s484 + $0x18] sm:$0xff]
  %vm492 = vcmask 1045504
  %v493 = vrot.slane %v475, 2
  %v494 = vrot.slane %v476, 2
  %v495 = vsel %vm492, %v493, %v494
  %v496 = vrot.slane %v477, 2
  %v497 = vsel %vm492, %v494, %v496
  %vm498 = vcmask 261120
  %v499 = vsel %vm498, %v495, 0
  %v501 = vsel %vm498, %v497, 0
  %v503 = vsel %vm498, %v496, 0
  %505 = vmatprep.subr.mxu0 0.0
  %506 = vmatpush1.msra.mxu0 %v485
  %507 = vmatprep.subr.mxu0 0.0
  %508 = vmatpush1.msra.mxu0 %v486
  %509 = vmatprep.subr.mxu0 0.0
  %510 = vmatpush1.msra.mxu0 %v487
  %511 = vmatprep.subr.mxu0 0.0
  %512 = vmatpush1.msra.mxu0 %v488
  %513 = vmatprep.subr.mxu0 0.0
  %514 = vmatpush1.msra.mxu0 0.0
  %515 = vmatprep.subr.mxu0 0.0
  %516 = vmatpush1.msra.mxu0 0.0
  %517 = vmatprep.subr.mxu0 0.0
  %518 = vmatpush1.msra.mxu0 0.0
  %519 = vmatprep.subr.mxu0 0.0
  %520 = vmatpush1.msra.mxu0 0.0
  %521 = vmatprep.subr.mxu0 0.0
  %522 = vmatpush1.msra.mxu0 0.0
  %523 = vmatprep.subr.mxu0 0.0
  %524 = vmatpush1.msra.mxu0 0.0
  %525 = vmatprep.subr.mxu0 0.0
  %526 = vmatpush1.msra.mxu0 0.0
  %527 = vmatprep.subr.mxu0 0.0
  %528 = vmatpush1.msra.mxu0 0.0
  %529 = vmatprep.subr.mxu0 0.0
  %530 = vmatpush1.msra.mxu0 0.0
  %531 = vmatprep.subr.mxu0 0.0
  %532 = vmatpush1.msra.mxu0 0.0
  %533 = vmatprep.subr.mxu0 0.0
  %534 = vmatpush1.msra.mxu0 0.0
  %535 = vmatprep.subr.mxu0 0.0
  %536 = vmatpush1.msra.mxu0 0.0
  %537 = vmatprep.subr.mxu0 0.0
  %538 = vmatpush1.msra.mxu0 0.0
  %539 = vmatprep.subr.mxu0 0.0
  %540 = vmatpush1.msra.mxu0 0.0
  %541 = vmatprep.subr.mxu0 0.0
  %542 = vmatpush1.msra.mxu0 0.0
  %543 = vmatprep.subr.mxu0 0.0
  %544 = vmatpush1.msra.mxu0 0.0
  %545 = vmatprep.subr.mxu0 0.0
  %546 = vmatpush1.msra.mxu0 0.0
  %547 = vmatprep.subr.mxu0 0.0
  %548 = vmatpush1.msra.mxu0 0.0
  %549 = vmatprep.subr.mxu0 0.0
  %550 = vmatpush1.msra.mxu0 0.0
  %551 = vmatprep.subr.mxu0 0.0
  %552 = vmatpush1.msra.mxu0 0.0
  %553 = vmatprep.subr.mxu0 0.0
  %554 = vmatpush1.msra.mxu0 0.0
  %555 = vmatprep.subr.mxu0 0.0
  %556 = vmatpush1.msra.mxu0 0.0
  %557 = vmatprep.subr.mxu0 0.0
  %558 = vmatpush1.msra.mxu0 0.0
  %559 = vmatprep.subr.mxu0 0.0
  %560 = vmatpush1.msra.mxu0 0.0
  %561 = vmatprep.subr.mxu0 0.0
  %562 = vmatpush1.msra.mxu0 0.0
  %563 = vmatprep.subr.mxu0 0.0
  %564 = vmatpush1.msra.mxu0 0.0
  %565 = vmatprep.subr.mxu0 0.0
  %566 = vmatpush1.msra.mxu0 0.0
  %567 = vmatprep.subr.mxu0 0.0
  %568 = vmatpush1.msra.mxu0 0.0
  %569 = vmatprep.mubr.f32.mxu0 0.0
  %570 = vmatmul.mubr.f32.gmra.mrb[0].mxu0 %v499
  %v571 = vpop.f32.mrb[0].mxu0
  %v572 = vadd.f32 0.0, %v571
  %v573 = vpop.f32.mrb[0].mxu0
  %574 = vmatprep.mubr.f32.mxu0 0.0
  %575 = vmatmul.mubr.f32.gmra.mrb[0].mxu0 %v501
  %v576 = vpop.f32.mrb[0].mxu0
  %v577 = vadd.f32 0.0, %v576
  %v578 = vpop.f32.mrb[0].mxu0
  %579 = vmatprep.mubr.f32.mxu0 0.0
  %580 = vmatmul.mubr.f32.gmra.mrb[0].mxu0 %v503
  %v581 = vpop.f32.mrb[0].mxu0
  %v582 = vadd.f32 0.0, %v581
  %v583 = vpop.f32.mrb[0].mxu0
  %584 = vdwg.mxu0
  %v586 = vsel %vm498, %v473, 0
  %v589 = vsel %vm498, %v474, 0
  %v591 = vsel %vm498, %v475, 0
  %593 = vmatprep.subr.mxu0 0.0
  %594 = vmatpush1.msra.mxu0 %v480
  %595 = vmatprep.subr.mxu0 0.0
  %596 = vmatpush1.msra.mxu0 %v481
  %597 = vmatprep.subr.mxu0 0.0
  %598 = vmatpush1.msra.mxu0 %v482
  %599 = vmatprep.subr.mxu0 0.0
  %600 = vmatpush1.msra.mxu0 %v483
  %601 = vmatprep.subr.mxu0 0.0
  %602 = vmatpush1.msra.mxu0 0.0
  %603 = vmatprep.subr.mxu0 0.0
  %604 = vmatpush1.msra.mxu0 0.0
  %605 = vmatprep.subr.mxu0 0.0
  %606 = vmatpush1.msra.mxu0 0.0
  %607 = vmatprep.subr.mxu0 0.0
  %608 = vmatpush1.msra.mxu0 0.0
  %609 = vmatprep.subr.mxu0 0.0
  %610 = vmatpush1.msra.mxu0 0.0
  %611 = vmatprep.subr.mxu0 0.0
  %612 = vmatpush1.msra.mxu0 0.0
  %613 = vmatprep.subr.mxu0 0.0
  %614 = vmatpush1.msra.mxu0 0.0
  %615 = vmatprep.subr.mxu0 0.0
  %616 = vmatpush1.msra.mxu0 0.0
  %617 = vmatprep.subr.mxu0 0.0
  %618 = vmatpush1.msra.mxu0 0.0
  %619 = vmatprep.subr.mxu0 0.0
  %620 = vmatpush1.msra.mxu0 0.0
  %621 = vmatprep.subr.mxu0 0.0
  %622 = vmatpush1.msra.mxu0 0.0
  %623 = vmatprep.subr.mxu0 0.0
  %624 = vmatpush1.msra.mxu0 0.0
  %625 = vmatprep.subr.mxu0 0.0
  %626 = vmatpush1.msra.mxu0 0.0
  %627 = vmatprep.subr.mxu0 0.0
  %628 = vmatpush1.msra.mxu0 0.0
  %629 = vmatprep.subr.mxu0 0.0
  %630 = vmatpush1.msra.mxu0 0.0
  %631 = vmatprep.subr.mxu0 0.0
  %632 = vmatpush1.msra.mxu0 0.0
  %633 = vmatprep.subr.mxu0 0.0
  %634 = vmatpush1.msra.mxu0 0.0
  %635 = vmatprep.subr.mxu0 0.0
  %636 = vmatpush1.msra.mxu0 0.0
  %637 = vmatprep.subr.mxu0 0.0
  %638 = vmatpush1.msra.mxu0 0.0
  %639 = vmatprep.subr.mxu0 0.0
  %640 = vmatpush1.msra.mxu0 0.0
  %641 = vmatprep.subr.mxu0 0.0
  %642 = vmatpush1.msra.mxu0 0.0
  %643 = vmatprep.subr.mxu0 0.0
  %644 = vmatpush1.msra.mxu0 0.0
  %645 = vmatprep.subr.mxu0 0.0
  %646 = vmatpush1.msra.mxu0 0.0
  %647 = vmatprep.subr.mxu0 0.0
  %648 = vmatpush1.msra.mxu0 0.0
  %649 = vmatprep.subr.mxu0 0.0
  %650 = vmatpush1.msra.mxu0 0.0
  %651 = vmatprep.subr.mxu0 0.0
  %652 = vmatpush1.msra.mxu0 0.0
  %653 = vmatprep.subr.mxu0 0.0
  %654 = vmatpush1.msra.mxu0 0.0
  %655 = vmatprep.subr.mxu0 0.0
  %656 = vmatpush1.msra.mxu0 0.0
  %657 = vmatprep.mubr.f32.mxu0 0.0
  %658 = vmatmul.mubr.f32.gmra.mrb[0].mxu0 %v586
  %v659 = vpop.f32.mrb[0].mxu0
  %v660 = vadd.f32 %v572, %v659
  %v661 = vpop.f32.mrb[0].mxu0
  %662 = vmatprep.mubr.f32.mxu0 0.0
  %663 = vmatmul.mubr.f32.gmra.mrb[0].mxu0 %v589
  %v664 = vpop.f32.mrb[0].mxu0
  %v665 = vadd.f32 %v577, %v664
  %v666 = vpop.f32.mrb[0].mxu0
  %667 = vmatprep.mubr.f32.mxu0 0.0
  %668 = vmatmul.mubr.f32.gmra.mrb[0].mxu0 %v591
  %v669 = vpop.f32.mrb[0].mxu0
  %v670 = vadd.f32 %v582, %v669
  %v671 = vpop.f32.mrb[0].mxu0
  %672 = vdwg.mxu0
  %s673 = scalar_lea.vmem %s3, 64
  %v674 = vld [vmem:[%s673] sm:$0xff]
  %v675 = vld [vmem:[%s673 + $0x8] sm:$0xff]
  %v676 = vld [vmem:[%s673 + $0x10] sm:$0xff]
  %v677 = vld [vmem:[%s673 + $0x18] sm:$0xff]
  %v680 = vrot.slane %v477, 4
  %v681 = vrot.slane %v478, 4
  %v682 = vsel %vm91, %v680, %v681
  %v683 = vrot.slane %v479, 4
  %v684 = vsel %vm91, %v681, %v683
  %v685 = vsel %vm498, %v682, 0
  %v687 = vsel %vm498, %v684, 0
  %v689 = vsel %vm498, %v683, 0
  %691 = vmatprep.subr.mxu0 0.0
  %692 = vmatpush1.msra.mxu0 %v674
  %693 = vmatprep.subr.mxu0 0.0
  %694 = vmatpush1.msra.mxu0 %v675
  %695 = vmatprep.subr.mxu0 0.0
  %696 = vmatpush1.msra.mxu0 %v676
  %697 = vmatprep.subr.mxu0 0.0
  %698 = vmatpush1.msra.mxu0 %v677
  %699 = vmatprep.subr.mxu0 0.0
  %700 = vmatpush1.msra.mxu0 0.0
  %701 = vmatprep.subr.mxu0 0.0
  %702 = vmatpush1.msra.mxu0 0.0
  %703 = vmatprep.subr.mxu0 0.0
  %704 = vmatpush1.msra.mxu0 0.0
  %705 = vmatprep.subr.mxu0 0.0
  %706 = vmatpush1.msra.mxu0 0.0
  %707 = vmatprep.subr.mxu0 0.0
  %708 = vmatpush1.msra.mxu0 0.0
  %709 = vmatprep.subr.mxu0 0.0
  %710 = vmatpush1.msra.mxu0 0.0
  %711 = vmatprep.subr.mxu0 0.0
  %712 = vmatpush1.msra.mxu0 0.0
  %713 = vmatprep.subr.mxu0 0.0
  %714 = vmatpush1.msra.mxu0 0.0
  %715 = vmatprep.subr.mxu0 0.0
  %716 = vmatpush1.msra.mxu0 0.0
  %717 = vmatprep.subr.mxu0 0.0
  %718 = vmatpush1.msra.mxu0 0.0
  %719 = vmatprep.subr.mxu0 0.0
  %720 = vmatpush1.msra.mxu0 0.0
  %721 = vmatprep.subr.mxu0 0.0
  %722 = vmatpush1.msra.mxu0 0.0
  %723 = vmatprep.subr.mxu0 0.0
  %724 = vmatpush1.msra.mxu0 0.0
  %725 = vmatprep.subr.mxu0 0.0
  %726 = vmatpush1.msra.mxu0 0.0
  %727 = vmatprep.subr.mxu0 0.0
  %728 = vmatpush1.msra.mxu0 0.0
  %729 = vmatprep.subr.mxu0 0.0
  %730 = vmatpush1.msra.mxu0 0.0
  %731 = vmatprep.subr.mxu0 0.0
  %732 = vmatpush1.msra.mxu0 0.0
  %733 = vmatprep.subr.mxu0 0.0
  %734 = vmatpush1.msra.mxu0 0.0
  %735 = vmatprep.subr.mxu0 0.0
  %736 = vmatpush1.msra.mxu0 0.0
  %737 = vmatprep.subr.mxu0 0.0
  %738 = vmatpush1.msra.mxu0 0.0
  %739 = vmatprep.subr.mxu0 0.0
  %740 = vmatpush1.msra.mxu0 0.0
  %741 = vmatprep.subr.mxu0 0.0
  %742 = vmatpush1.msra.mxu0 0.0
  %743 = vmatprep.subr.mxu0 0.0
  %744 = vmatpush1.msra.mxu0 0.0
  %745 = vmatprep.subr.mxu0 0.0
  %746 = vmatpush1.msra.mxu0 0.0
  %747 = vmatprep.subr.mxu0 0.0
  %748 = vmatpush1.msra.mxu0 0.0
  %749 = vmatprep.subr.mxu0 0.0
  %750 = vmatpush1.msra.mxu0 0.0
  %751 = vmatprep.subr.mxu0 0.0
  %752 = vmatpush1.msra.mxu0 0.0
  %753 = vmatprep.subr.mxu0 0.0
  %754 = vmatpush1.msra.mxu0 0.0
  %755 = vmatprep.mubr.f32.mxu0 0.0
  %756 = vmatmul.mubr.f32.gmra.mrb[0].mxu0 %v685
  %v757 = vpop.f32.mrb[0].mxu0
  %v758 = vadd.f32 0.0, %v757
  %v759 = vpop.f32.mrb[0].mxu0
  %760 = vmatprep.mubr.f32.mxu0 0.0
  %761 = vmatmul.mubr.f32.gmra.mrb[0].mxu0 %v687
  %v762 = vpop.f32.mrb[0].mxu0
  %v763 = vadd.f32 0.0, %v762
  %v764 = vpop.f32.mrb[0].mxu0
  %765 = vmatprep.mubr.f32.mxu0 0.0
  %766 = vmatmul.mubr.f32.gmra.mrb[0].mxu0 %v689
  %v767 = vpop.f32.mrb[0].mxu0
  %v768 = vadd.f32 0.0, %v767
  %v769 = vpop.f32.mrb[0].mxu0
  %770 = vdwg.mxu0
  %v771 = vadd.f32 %v660, %v758
  %v772 = vadd.f32 %v665, %v763
  %v773 = vadd.f32 %v670, %v768
  %v774 = vld [vmem:[%s4] sm:$0x1]
  %v776 = vlaneseq
  %v777 = vshrl.u32 %v776, 7
  %v778 = vsub.s32 0, %v777
  %v779 = vrot.slane %v774, %v778
  %v781 = vadd.f32 %v771, %v779
  %v782 = vadd.f32 %v772, %v779
  %v783 = vadd.f32 %v773, %v779
  %v784 = vld [vmem:[%s5] sm:$0xff]
  %v785 = vld [vmem:[%s5 + $0x8] sm:$0xff]
  %v786 = vld [vmem:[%s5 + $0x10] sm:$0xff]
  %v787 = vld [vmem:[%s5 + $0x18] sm:$0xff]
  %s788 = scalar_lea.vmem %s5, 32
  %v789 = vld [vmem:[%s788] sm:$0xff]
  %v790 = vld [vmem:[%s788 + $0x8] sm:$0xff]
  %v791 = vld [vmem:[%s788 + $0x10] sm:$0xff]
  %v792 = vld [vmem:[%s788 + $0x18] sm:$0xff]
  %v795 = vrot.slane %v781, 6
  %v796 = vrot.slane %v782, 6
  %v797 = vsel %vm60, %v795, %v796
  %v798 = vsel %vm498, %v797, 0
  %800 = vmatprep.subr.mxu0 0.0
  %801 = vmatpush1.msra.mxu0 %v789
  %802 = vmatprep.subr.mxu0 0.0
  %803 = vmatpush1.msra.mxu0 %v790
  %804 = vmatprep.subr.mxu0 0.0
  %805 = vmatpush1.msra.mxu0 %v791
  %806 = vmatprep.subr.mxu0 0.0
  %807 = vmatpush1.msra.mxu0 %v792
  %808 = vmatprep.subr.mxu0 0.0
  %809 = vmatpush1.msra.mxu0 0.0
  %810 = vmatprep.subr.mxu0 0.0
  %811 = vmatpush1.msra.mxu0 0.0
  %812 = vmatprep.subr.mxu0 0.0
  %813 = vmatpush1.msra.mxu0 0.0
  %814 = vmatprep.subr.mxu0 0.0
  %815 = vmatpush1.msra.mxu0 0.0
  %816 = vmatprep.subr.mxu0 0.0
  %817 = vmatpush1.msra.mxu0 0.0
  %818 = vmatprep.subr.mxu0 0.0
  %819 = vmatpush1.msra.mxu0 0.0
  %820 = vmatprep.subr.mxu0 0.0
  %821 = vmatpush1.msra.mxu0 0.0
  %822 = vmatprep.subr.mxu0 0.0
  %823 = vmatpush1.msra.mxu0 0.0
  %824 = vmatprep.subr.mxu0 0.0
  %825 = vmatpush1.msra.mxu0 0.0
  %826 = vmatprep.subr.mxu0 0.0
  %827 = vmatpush1.msra.mxu0 0.0
  %828 = vmatprep.subr.mxu0 0.0
  %829 = vmatpush1.msra.mxu0 0.0
  %830 = vmatprep.subr.mxu0 0.0
  %831 = vmatpush1.msra.mxu0 0.0
  %832 = vmatprep.subr.mxu0 0.0
  %833 = vmatpush1.msra.mxu0 0.0
  %834 = vmatprep.subr.mxu0 0.0
  %835 = vmatpush1.msra.mxu0 0.0
  %836 = vmatprep.subr.mxu0 0.0
  %837 = vmatpush1.msra.mxu0 0.0
  %838 = vmatprep.subr.mxu0 0.0
  %839 = vmatpush1.msra.mxu0 0.0
  %840 = vmatprep.subr.mxu0 0.0
  %841 = vmatpush1.msra.mxu0 0.0
  %842 = vmatprep.subr.mxu0 0.0
  %843 = vmatpush1.msra.mxu0 0.0
  %844 = vmatprep.subr.mxu0 0.0
  %845 = vmatpush1.msra.mxu0 0.0
  %846 = vmatprep.subr.mxu0 0.0
  %847 = vmatpush1.msra.mxu0 0.0
  %848 = vmatprep.subr.mxu0 0.0
  %849 = vmatpush1.msra.mxu0 0.0
  %850 = vmatprep.subr.mxu0 0.0
  %851 = vmatpush1.msra.mxu0 0.0
  %852 = vmatprep.subr.mxu0 0.0
  %853 = vmatpush1.msra.mxu0 0.0
  %854 = vmatprep.subr.mxu0 0.0
  %855 = vmatpush1.msra.mxu0 0.0
  %856 = vmatprep.subr.mxu0 0.0
  %857 = vmatpush1.msra.mxu0 0.0
  %858 = vmatprep.subr.mxu0 0.0
  %859 = vmatpush1.msra.mxu0 0.0
  %860 = vmatprep.subr.mxu0 0.0
  %861 = vmatpush1.msra.mxu0 0.0
  %862 = vmatprep.subr.mxu0 0.0
  %863 = vmatpush1.msra.mxu0 0.0
  %864 = vmatprep.mubr.f32.mxu0 0.0
  %865 = vmatmul.mubr.f32.gmra.mrb[0].mxu0 %v798
  %v866 = vpop.f32.mrb[0].mxu0
  %v867 = vadd.f32 0.0, %v866
  %v868 = vpop.f32.mrb[0].mxu0
  %869 = vdwg.mxu0
  %v870 = vsel %vm498, %v781, 0
  %872 = vmatprep.subr.mxu0 0.0
  %873 = vmatpush1.msra.mxu0 %v784
  %874 = vmatprep.subr.mxu0 0.0
  %875 = vmatpush1.msra.mxu0 %v785
  %876 = vmatprep.subr.mxu0 0.0
  %877 = vmatpush1.msra.mxu0 %v786
  %878 = vmatprep.subr.mxu0 0.0
  %879 = vmatpush1.msra.mxu0 %v787
  %880 = vmatprep.subr.mxu0 0.0
  %881 = vmatpush1.msra.mxu0 0.0
  %882 = vmatprep.subr.mxu0 0.0
  %883 = vmatpush1.msra.mxu0 0.0
  %884 = vmatprep.subr.mxu0 0.0
  %885 = vmatpush1.msra.mxu0 0.0
  %886 = vmatprep.subr.mxu0 0.0
  %887 = vmatpush1.msra.mxu0 0.0
  %888 = vmatprep.subr.mxu0 0.0
  %889 = vmatpush1.msra.mxu0 0.0
  %890 = vmatprep.subr.mxu0 0.0
  %891 = vmatpush1.msra.mxu0 0.0
  %892 = vmatprep.subr.mxu0 0.0
  %893 = vmatpush1.msra.mxu0 0.0
  %894 = vmatprep.subr.mxu0 0.0
  %895 = vmatpush1.msra.mxu0 0.0
  %896 = vmatprep.subr.mxu0 0.0
  %897 = vmatpush1.msra.mxu0 0.0
  %898 = vmatprep.subr.mxu0 0.0
  %899 = vmatpush1.msra.mxu0 0.0
  %900 = vmatprep.subr.mxu0 0.0
  %901 = vmatpush1.msra.mxu0 0.0
  %902 = vmatprep.subr.mxu0 0.0
  %903 = vmatpush1.msra.mxu0 0.0
  %904 = vmatprep.subr.mxu0 0.0
  %905 = vmatpush1.msra.mxu0 0.0
  %906 = vmatprep.subr.mxu0 0.0
  %907 = vmatpush1.msra.mxu0 0.0
  %908 = vmatprep.subr.mxu0 0.0
  %909 = vmatpush1.msra.mxu0 0.0
  %910 = vmatprep.subr.mxu0 0.0
  %911 = vmatpush1.msra.mxu0 0.0
  %912 = vmatprep.subr.mxu0 0.0
  %913 = vmatpush1.msra.mxu0 0.0
  %914 = vmatprep.subr.mxu0 0.0
  %915 = vmatpush1.msra.mxu0 0.0
  %916 = vmatprep.subr.mxu0 0.0
  %917 = vmatpush1.msra.mxu0 0.0
  %918 = vmatprep.subr.mxu0 0.0
  %919 = vmatpush1.msra.mxu0 0.0
  %920 = vmatprep.subr.mxu0 0.0
  %921 = vmatpush1.msra.mxu0 0.0
  %922 = vmatprep.subr.mxu0 0.0
  %923 = vmatpush1.msra.mxu0 0.0
  %924 = vmatprep.subr.mxu0 0.0
  %925 = vmatpush1.msra.mxu0 0.0
  %926 = vmatprep.subr.mxu0 0.0
  %927 = vmatpush1.msra.mxu0 0.0
  %928 = vmatprep.subr.mxu0 0.0
  %929 = vmatpush1.msra.mxu0 0.0
  %930 = vmatprep.subr.mxu0 0.0
  %931 = vmatpush1.msra.mxu0 0.0
  %932 = vmatprep.subr.mxu0 0.0
  %933 = vmatpush1.msra.mxu0 0.0
  %934 = vmatprep.subr.mxu0 0.0
  %935 = vmatpush1.msra.mxu0 0.0
  %936 = vmatprep.mubr.f32.mxu0 0.0
  %937 = vmatmul.mubr.f32.gmra.mrb[0].mxu0 %v870
  %v938 = vpop.f32.mrb[0].mxu0
  %v939 = vadd.f32 %v867, %v938
  %v940 = vpop.f32.mrb[0].mxu0
  %941 = vdwg.mxu0
  %s942 = scalar_lea.vmem %s5, 64
  %v943 = vld [vmem:[%s942] sm:$0xff]
  %v944 = vld [vmem:[%s942 + $0x8] sm:$0xff]
  %v945 = vld [vmem:[%s942 + $0x10] sm:$0xff]
  %v946 = vld [vmem:[%s942 + $0x18] sm:$0xff]
  %v948 = vrot.slane %v782, 4
  %v949 = vrot.slane %v783, 4
  %v950 = vsel %vm91, %v948, %v949
  %v951 = vsel %vm498, %v950, 0
  %953 = vmatprep.subr.mxu0 0.0
  %954 = vmatpush1.msra.mxu0 %v943
  %955 = vmatprep.subr.mxu0 0.0
  %956 = vmatpush1.msra.mxu0 %v944
  %957 = vmatprep.subr.mxu0 0.0
  %958 = vmatpush1.msra.mxu0 %v945
  %959 = vmatprep.subr.mxu0 0.0
  %960 = vmatpush1.msra.mxu0 %v946
  %961 = vmatprep.subr.mxu0 0.0
  %962 = vmatpush1.msra.mxu0 0.0
  %963 = vmatprep.subr.mxu0 0.0
  %964 = vmatpush1.msra.mxu0 0.0
  %965 = vmatprep.subr.mxu0 0.0
  %966 = vmatpush1.msra.mxu0 0.0
  %967 = vmatprep.subr.mxu0 0.0
  %968 = vmatpush1.msra.mxu0 0.0
  %969 = vmatprep.subr.mxu0 0.0
  %970 = vmatpush1.msra.mxu0 0.0
  %971 = vmatprep.subr.mxu0 0.0
  %972 = vmatpush1.msra.mxu0 0.0
  %973 = vmatprep.subr.mxu0 0.0
  %974 = vmatpush1.msra.mxu0 0.0
  %975 = vmatprep.subr.mxu0 0.0
  %976 = vmatpush1.msra.mxu0 0.0
  %977 = vmatprep.subr.mxu0 0.0
  %978 = vmatpush1.msra.mxu0 0.0
  %979 = vmatprep.subr.mxu0 0.0
  %980 = vmatpush1.msra.mxu0 0.0
  %981 = vmatprep.subr.mxu0 0.0
  %982 = vmatpush1.msra.mxu0 0.0
  %983 = vmatprep.subr.mxu0 0.0
  %984 = vmatpush1.msra.mxu0 0.0
  %985 = vmatprep.subr.mxu0 0.0
  %986 = vmatpush1.msra.mxu0 0.0
  %987 = vmatprep.subr.mxu0 0.0
  %988 = vmatpush1.msra.mxu0 0.0
  %989 = vmatprep.subr.mxu0 0.0
  %990 = vmatpush1.msra.mxu0 0.0
  %991 = vmatprep.subr.mxu0 0.0
  %992 = vmatpush1.msra.mxu0 0.0
  %993 = vmatprep.subr.mxu0 0.0
  %994 = vmatpush1.msra.mxu0 0.0
  %995 = vmatprep.subr.mxu0 0.0
  %996 = vmatpush1.msra.mxu0 0.0
  %997 = vmatprep.subr.mxu0 0.0
  %998 = vmatpush1.msra.mxu0 0.0
  %999 = vmatprep.subr.mxu0 0.0
  %1000 = vmatpush1.msra.mxu0 0.0
  %1001 = vmatprep.subr.mxu0 0.0
  %1002 = vmatpush1.msra.mxu0 0.0
  %1003 = vmatprep.subr.mxu0 0.0
  %1004 = vmatpush1.msra.mxu0 0.0
  %1005 = vmatprep.subr.mxu0 0.0
  %1006 = vmatpush1.msra.mxu0 0.0
  %1007 = vmatprep.subr.mxu0 0.0
  %1008 = vmatpush1.msra.mxu0 0.0
  %1009 = vmatprep.subr.mxu0 0.0
  %1010 = vmatpush1.msra.mxu0 0.0
  %1011 = vmatprep.subr.mxu0 0.0
  %1012 = vmatpush1.msra.mxu0 0.0
  %1013 = vmatprep.subr.mxu0 0.0
  %1014 = vmatpush1.msra.mxu0 0.0
  %1015 = vmatprep.subr.mxu0 0.0
  %1016 = vmatpush1.msra.mxu0 0.0
  %1017 = vmatprep.mubr.f32.mxu0 0.0
  %1018 = vmatmul.mubr.f32.gmra.mrb[0].mxu0 %v951
  %v1019 = vpop.f32.mrb[0].mxu0
  %v1020 = vadd.f32 0.0, %v1019
  %v1021 = vpop.f32.mrb[0].mxu0
  %1022 = vdwg.mxu0
  %v1023 = vadd.f32 %v939, %v1020
  %v1024 = vld [vmem:[#allocation2] sm:$0x1]
  %v1026 = vlaneseq
  %v1027 = vshrl.u32 %v1026, 7
  %v1028 = vsub.s32 0, %v1027
  %v1029 = vrot.slane %v1024, %v1028
  %v1031 = vadd.f32 %v1023, %v1029
  %vm1032 = vcmask 5120
  %1033 = vst.msk [vmem:[%s7] sm:$0x3f] %vm1032, %v1031
  // Predicated region
  $region30: #{tcn_forward.1} parent=0 // pred_check
    _
  $region31: #{tcn_forward.1} parent=0 // pred_check_branch
    %1035 = sbr.rel (0) target = $region33
  $region32: #{tcn_forward.1} parent=0 // pred_region
    _
  $region33: #{tcn_forward.1} parent=0 // pred_fallthru
    _
  // Predicated region
  $region34: #{tcn_forward.1} parent=0 // pred_check
    _
  $region35: #{tcn_forward.1} parent=0 // pred_check_branch
    %1037 = sbr.rel (0) target = $region37
  $region36: #{tcn_forward.1} parent=0 // pred_region
    _
  $region37: #{tcn_forward.1} parent=0 // pred_fallthru
    _

</llo_original>
